<compile_context>
chip_gen: v6e
topology: v6e:2x2x1
jax: 0.10.0
libtpu: 0.0.40
codegen_flags: <defaults>
</compile_context>

<pallas_src>
import functools

import numpy as np
import jax
import jax.numpy as jnp
from jax.experimental import pallas as pl
from jax.experimental.pallas import tpu as pltpu


ACT_DTYPE = jnp.bfloat16              # activations / weights on the MXU path
VMEM_LIMIT = 48 * 1024 * 1024         # explicit scoped-VMEM budget (fits v5e/v6e/v7x)


def _round_up(x, m):
    return (x + m - 1) // m * m


def _cparams(sem):
    return pltpu.CompilerParams(dimension_semantics=sem,
                                vmem_limit_bytes=VMEM_LIMIT)


def _pick_tile(m, cap=512):
    """Row-tile size (multiple of 8, ~<= cap) and number of tiles covering m."""
    nm = max(1, -(-m // cap))
    tm = _round_up(-(-m // nm), 8)
    nm = -(-m // tm)
    return tm, nm


# ---------------------------------------------------------------------------
# Kernel 1: implicit-GEMM conv (stride 1) with fused BN-bias + ReLU
# ---------------------------------------------------------------------------
def _conv_s1_kernel(x_ref, w_ref, b_ref, o_ref, *, taps_off, tm, halo):
    # x_ref: (1, L, Cin) bf16   whole padded image, spatially flattened
    # w_ref: (T, Cin, Cout) bf16, b_ref: (1, Cout) f32, o_ref: (1, tm, Cout) bf16
    base = pl.multiple_of(pl.program_id(1) * tm, 8)
    big = x_ref[0, pl.ds(base, tm + halo), :]            # aligned dynamic slice
    acc = None
    for t, off in enumerate(taps_off):                   # static tap unroll
        a = big[off:off + tm, :]                         # static in-VMEM slice
        d = jnp.dot(a, w_ref[t], preferred_element_type=jnp.float32)
        acc = d if acc is None else acc + d
    o_ref[0] = jnp.maximum(acc + b_ref[...], 0.0).astype(o_ref.dtype)


def conv_s1(x, p):
    """Stride-1 conv + folded BN + ReLU.  x: (N, H, W, Cin) bf16 -> (N, oh, ow, Cout)."""
    N, H, W, Cin = x.shape
    kh, kw = p["kh"], p["kw"]
    ph, pw = p["pad"]
    Cout = p["b"].shape[1]
    Hp, Wp = H + 2 * ph, W + 2 * pw
    oh, ow = Hp - kh + 1, Wp - kw + 1
    M = oh * Wp                                   # "wide" output rows per image
    tm, nm = _pick_tile(M)
    halo = (kh - 1) * Wp + (kw - 1)
    need = nm * tm + halo                         # flat rows the kernel may touch
    extra_h = max(0, -(-(need - Hp * Wp) // Wp))
    xp = jnp.pad(x, ((0, 0), (ph, ph + extra_h), (pw, pw), (0, 0)))
    L = (Hp + extra_h) * Wp
    xf = xp.reshape(N, L, Cin)                    # free reshape (contiguous NHWC)
    taps_off = [i * Wp + j for i in range(kh) for j in range(kw)]

    kernel = functools.partial(_conv_s1_kernel, taps_off=taps_off, tm=tm, halo=halo)
    out = pl.pallas_call(
        kernel,
        out_shape=jax.ShapeDtypeStruct((N, nm * tm, Cout), ACT_DTYPE),
        grid=(N, nm),
        in_specs=[
            pl.BlockSpec((1, L, Cin), lambda n, m: (n, 0, 0)),        # 1 DMA per image
            pl.BlockSpec((kh * kw, Cin, Cout), lambda n, m: (0, 0, 0)),
            pl.BlockSpec((1, Cout), lambda n, m: (0, 0)),
        ],
        out_specs=pl.BlockSpec((1, tm, Cout), lambda n, m: (n, m, 0)),
        compiler_params=_cparams(("parallel", "parallel")),
    )(xf, p["w"], p["b"])

    out = out[:, :oh * Wp, :].reshape(N, oh, Wp, Cout)
    if ow != Wp:
        out = out[:, :, :ow, :]                   # drop the wide-garbage columns
    return out


def conv1x1_fused(x, plist):
    """Fuse several same-input 1x1 convs into one matmul (concat weights on Cout)."""
    w = jnp.concatenate([p["w"] for p in plist], axis=-1)     # (1, Cin, sum Cout)
    b = jnp.concatenate([p["b"] for p in plist], axis=-1)     # (1, sum Cout)
    fused = dict(w=w, b=b, kh=1, kw=1, stride=1, pad=(0, 0))
    y = conv_s1(x, fused)
    outs, off = [], 0
    for p in plist:
        c = p["b"].shape[1]
        outs.append(y[..., off:off + c])
        off += c
    return outs


# ---------------------------------------------------------------------------
# Kernel 2: single-shot full-K matmul (+bias+ReLU) for the 5 stride-2 convs
# ---------------------------------------------------------------------------
def _matmul_bias_relu_kernel(a_ref, b_ref, bias_ref, o_ref):
    acc = jnp.dot(a_ref[...], b_ref[...], preferred_element_type=jnp.float32)
    o_ref[...] = jnp.maximum(acc + bias_ref[...], 0.0).astype(o_ref.dtype)


def matmul_bias_relu(a, b, bias):
    """relu(a @ b + bias); a:(M,K) bf16, b:(K,N) bf16, bias:(1,N) f32 -> (M,N) bf16."""
    M, K = a.shape
    _, Nc = b.shape
    tm, nm = _pick_tile(M)
    Mp = nm * tm
    if Mp != M:
        a = jnp.pad(a, ((0, Mp - M), (0, 0)))
    out = pl.pallas_call(
        _matmul_bias_relu_kernel,
        out_shape=jax.ShapeDtypeStruct((Mp, Nc), ACT_DTYPE),
        grid=(nm,),
        in_specs=[
            pl.BlockSpec((tm, K), lambda i: (i, 0)),
            pl.BlockSpec((K, Nc), lambda i: (0, 0)),
            pl.BlockSpec((1, Nc), lambda i: (0, 0)),
        ],
        out_specs=pl.BlockSpec((tm, Nc), lambda i: (i, 0)),
        compiler_params=_cparams(("parallel",)),
    )(a, b, bias)
    return out[:M]


def conv_im2col(x, p):
    """Generic conv via im2col + matmul (used only for the few stride-2 convs)."""
    N, H, W, Cin = x.shape
    kh, kw, s = p["kh"], p["kw"], p["stride"]
    ph, pw = p["pad"]
    xp = x if (ph == 0 and pw == 0) else jnp.pad(x, ((0, 0), (ph, ph), (pw, pw), (0, 0)))
    Hp, Wp = H + 2 * ph, W + 2 * pw
    oh = (Hp - kh) // s + 1
    ow = (Wp - kw) // s + 1
    cols = []
    for i in range(kh):
        for j in range(kw):
            cols.append(xp[:, i:i + s * (oh - 1) + 1:s, j:j + s * (ow - 1) + 1:s, :])
    patches = jnp.concatenate(cols, axis=-1).reshape(N * oh * ow, kh * kw * Cin)
    K = kh * kw * Cin
    K8 = _round_up(K, 8)
    w, b = p["w_flat"], p["b"]
    if K8 != K:                                   # only c1a (K=27 -> 32); never to 128
        patches = jnp.pad(patches, ((0, 0), (0, K8 - K)))
        w = jnp.pad(w, ((0, K8 - K), (0, 0)))
    y = matmul_bias_relu(patches, w, b)
    return y.reshape(N, oh, ow, -1)


def conv_bn_relu(x, p):
    return conv_s1(x, p) if p["stride"] == 1 else conv_im2col(x, p)


# ---------------------------------------------------------------------------
# Kernel 3: window pooling (3x3, stride 1) reduced entirely in VMEM
# ---------------------------------------------------------------------------
def _win_pool_kernel(x_ref, o_ref, *, kh, kw, oh, ow, is_max, inv):
    acc = None
    for i in range(kh):
        for j in range(kw):
            v = x_ref[0, i:i + oh, j:j + ow, :]
            if not is_max:
                v = v.astype(jnp.float32)
            acc = v if acc is None else (jnp.maximum(acc, v) if is_max else acc + v)
    if not is_max:
        acc = acc * inv
    o_ref[0] = acc.astype(o_ref.dtype)


def window_pool_s1(x, kh, kw, pad, mode):
    """stride-1 kh x kw pooling with zero pad (avg == count_include_pad=True)."""
    N, H, W, C = x.shape
    ph, pw = pad
    xp = x if (ph == 0 and pw == 0) else jnp.pad(x, ((0, 0), (ph, ph), (pw, pw), (0, 0)))
    Hp, Wp = H + 2 * ph, W + 2 * pw
    oh, ow = Hp - kh + 1, Wp - kw + 1
    kernel = functools.partial(_win_pool_kernel, kh=kh, kw=kw, oh=oh, ow=ow,
                               is_max=(mode == "max"), inv=1.0 / float(kh * kw))
    return pl.pallas_call(
        kernel,
        out_shape=jax.ShapeDtypeStruct((N, oh, ow, C), x.dtype),
        grid=(N,),
        in_specs=[pl.BlockSpec((1, Hp, Wp, C), lambda n: (n, 0, 0, 0))],
        out_specs=pl.BlockSpec((1, oh, ow, C), lambda n: (n, 0, 0, 0)),
        compiler_params=_cparams(("parallel",)),
    )(xp)


def max_pool_3x3_s2(x):
    # stride-1 in-kernel max pool, then cheap spatial subsample (matches k=3, s=2)
    y = window_pool_s1(x, 3, 3, (0, 0), "max")
    return y[:, ::2, ::2, :]


def avg_pool_3x3_s1_p1(x):
    return window_pool_s1(x, 3, 3, (1, 1), "avg")


def _gap_kernel(x_ref, o_ref, *, inv):
    v = x_ref[...].astype(jnp.float32)                      # (1, H, W, C)
    o_ref[...] = (jnp.sum(v, axis=(1, 2)) * inv).astype(o_ref.dtype)


def global_avg_pool(x):
    """F.avg_pool2d(x, kernel_size=8) on an 8x8 map == global mean -> (N, C) f32."""
    N, H, W, C = x.shape
    kernel = functools.partial(_gap_kernel, inv=1.0 / float(H * W))
    return pl.pallas_call(
        kernel,
        out_shape=jax.ShapeDtypeStruct((N, C), jnp.float32),
        grid=(N,),
        in_specs=[pl.BlockSpec((1, H, W, C), lambda n: (n, 0, 0, 0))],
        out_specs=pl.BlockSpec((1, C), lambda n: (n, 0)),
        compiler_params=_cparams(("parallel",)),
    )(x)


# ---------------------------------------------------------------------------
# BasicConv2d params (conv + folded eval-BN), synthetic deterministic weights
# ---------------------------------------------------------------------------
def make_conv(rng, in_c, out_c, kh, kw, stride=1, pad=(0, 0)):
    fan_in = in_c * kh * kw
    w = rng.standard_normal((out_c, in_c, kh, kw), dtype=np.float32)
    w *= np.float32(np.sqrt(2.0 / fan_in))
    gamma = (1.0 + 0.1 * rng.standard_normal(out_c)).astype(np.float32)
    beta = (0.05 * rng.standard_normal(out_c)).astype(np.float32)
    mean = (0.02 * rng.standard_normal(out_c)).astype(np.float32)
    var = (1.0 + 0.1 * np.abs(rng.standard_normal(out_c))).astype(np.float32)
    scale = gamma / np.sqrt(var + 1e-3)           # BatchNorm2d(eps=0.001), eval mode
    w_eff = w * scale[:, None, None, None]
    b_eff = (beta - mean * scale).astype(np.float32)
    # tap-major layout (kh, kw, in_c, out_c) matches both conv paths' ordering
    w_taps = np.transpose(w_eff, (2, 3, 1, 0)).reshape(kh * kw, in_c, out_c)
    return dict(
        w=jnp.asarray(w_taps, dtype=ACT_DTYPE),                        # (T, Cin, Cout)
        w_flat=jnp.asarray(w_taps.reshape(kh * kw * in_c, out_c), dtype=ACT_DTYPE),
        b=jnp.asarray(b_eff.reshape(1, out_c)),                        # (1, Cout) f32
        kh=kh, kw=kw, stride=stride, pad=pad)


# ---------------------------------------------------------------------------
# Inception v3 blocks (torchvision structure)
# ---------------------------------------------------------------------------
def make_inception_a(rng, in_c, pool_features):
    return dict(
        b1x1=make_conv(rng, in_c, 64, 1, 1),
        b5_1=make_conv(rng, in_c, 48, 1, 1),
        b5_2=make_conv(rng, 48, 64, 5, 5, pad=(2, 2)),
        b3_1=make_conv(rng, in_c, 64, 1, 1),
        b3_2=make_conv(rng, 64, 96, 3, 3, pad=(1, 1)),
        b3_3=make_conv(rng, 96, 96, 3, 3, pad=(1, 1)),
        bp=make_conv(rng, in_c, pool_features, 1, 1),
    )


def make_inception_b(rng, in_c):
    return dict(
        b3=make_conv(rng, in_c, 384, 3, 3, stride=2),
        b3dbl_1=make_conv(rng, in_c, 64, 1, 1),
        b3dbl_2=make_conv(rng, 64, 96, 3, 3, pad=(1, 1)),
        b3dbl_3=make_conv(rng, 96, 96, 3, 3, stride=2),
    )


def make_inception_c(rng, in_c, c7):
    return dict(
        b1=make_conv(rng, in_c, 192, 1, 1),
        b7_1=make_conv(rng, in_c, c7, 1, 1),
        b7_2=make_conv(rng, c7, c7, 1, 7, pad=(0, 3)),
        b7_3=make_conv(rng, c7, 192, 7, 1, pad=(3, 0)),
        b7d_1=make_conv(rng, in_c, c7, 1, 1),
        b7d_2=make_conv(rng, c7, c7, 7, 1, pad=(3, 0)),
        b7d_3=make_conv(rng, c7, c7, 1, 7, pad=(0, 3)),
        b7d_4=make_conv(rng, c7, c7, 7, 1, pad=(3, 0)),
        b7d_5=make_conv(rng, c7, 192, 1, 7, pad=(0, 3)),
        bp=make_conv(rng, in_c, 192, 1, 1),
    )


def make_inception_d(rng, in_c):
    return dict(
        b3_1=make_conv(rng, in_c, 192, 1, 1),
        b3_2=make_conv(rng, 192, 320, 3, 3, stride=2),
        b7_1=make_conv(rng, in_c, 192, 1, 1),
        b7_2=make_conv(rng, 192, 192, 1, 7, pad=(0, 3)),
        b7_3=make_conv(rng, 192, 192, 7, 1, pad=(3, 0)),
        b7_4=make_conv(rng, 192, 192, 3, 3, stride=2),
    )


def make_inception_e(rng, in_c):
    return dict(
        b1=make_conv(rng, in_c, 320, 1, 1),
        b3_1=make_conv(rng, in_c, 384, 1, 1),
        b3_2a=make_conv(rng, 384, 384, 1, 3, pad=(0, 1)),
        b3_2b=make_conv(rng, 384, 384, 3, 1, pad=(1, 0)),
        b3d_1=make_conv(rng, in_c, 448, 1, 1),
        b3d_2=make_conv(rng, 448, 384, 3, 3, pad=(1, 1)),
        b3d_3a=make_conv(rng, 384, 384, 1, 3, pad=(0, 1)),
        b3d_3b=make_conv(rng, 384, 384, 3, 1, pad=(1, 0)),
        bp=make_conv(rng, in_c, 192, 1, 1),
    )


def inception_a(p, x):
    b1, b5, b3 = conv1x1_fused(x, [p["b1x1"], p["b5_1"], p["b3_1"]])
    b5 = conv_bn_relu(b5, p["b5_2"])
    b3 = conv_bn_relu(conv_bn_relu(b3, p["b3_2"]), p["b3_3"])
    bp = conv_bn_relu(avg_pool_3x3_s1_p1(x), p["bp"])
    return jnp.concatenate([b1, b5, b3, bp], axis=-1)


def inception_b(p, x):
    b3 = conv_bn_relu(x, p["b3"])
    bd = conv_bn_relu(conv_bn_relu(conv_bn_relu(x, p["b3dbl_1"]), p["b3dbl_2"]),
                      p["b3dbl_3"])
    bp = max_pool_3x3_s2(x)
    return jnp.concatenate([b3, bd, bp], axis=-1)


def inception_c(p, x):
    b1, b7, bd = conv1x1_fused(x, [p["b1"], p["b7_1"], p["b7d_1"]])
    b7 = conv_bn_relu(conv_bn_relu(b7, p["b7_2"]), p["b7_3"])
    for name in ("b7d_2", "b7d_3", "b7d_4", "b7d_5"):
        bd = conv_bn_relu(bd, p[name])
    bp = conv_bn_relu(avg_pool_3x3_s1_p1(x), p["bp"])
    return jnp.concatenate([b1, b7, bd, bp], axis=-1)


def inception_d(p, x):
    b3, b7 = conv1x1_fused(x, [p["b3_1"], p["b7_1"]])
    b3 = conv_bn_relu(b3, p["b3_2"])
    for name in ("b7_2", "b7_3", "b7_4"):
        b7 = conv_bn_relu(b7, p[name])
    bp = max_pool_3x3_s2(x)
    return jnp.concatenate([b3, b7, bp], axis=-1)


def inception_e(p, x):
    b1, b3, bd = conv1x1_fused(x, [p["b1"], p["b3_1"], p["b3d_1"]])
    b3 = jnp.concatenate([conv_bn_relu(b3, p["b3_2a"]),
                          conv_bn_relu(b3, p["b3_2b"])], axis=-1)
    bd = conv_bn_relu(bd, p["b3d_2"])
    bd = jnp.concatenate([conv_bn_relu(bd, p["b3d_3a"]),
                          conv_bn_relu(bd, p["b3d_3b"])], axis=-1)
    bp = conv_bn_relu(avg_pool_3x3_s1_p1(x), p["bp"])
    return jnp.concatenate([b1, b3, bd, bp], axis=-1)


def make_params(rng):
    return dict(
        c1a=make_conv(rng, 3, 32, 3, 3, stride=2),
        c2a=make_conv(rng, 32, 32, 3, 3),
        c2b=make_conv(rng, 32, 64, 3, 3, pad=(1, 1)),
        c3b=make_conv(rng, 64, 80, 1, 1),
        c4a=make_conv(rng, 80, 192, 3, 3),
        m5b=make_inception_a(rng, 192, 32),
        m5c=make_inception_a(rng, 256, 64),
        m5d=make_inception_a(rng, 288, 64),
        m6a=make_inception_b(rng, 288),
        m6b=make_inception_c(rng, 768, 128),
        m6c=make_inception_c(rng, 768, 160),
        m6d=make_inception_c(rng, 768, 160),
        m6e=make_inception_c(rng, 768, 192),
        m7a=make_inception_d(rng, 768),
        m7b=make_inception_e(rng, 1280),
        m7c=make_inception_e(rng, 2048),
    )


def forward(P, x_nchw):
    # layout: input NCHW (PyTorch), internal NHWC bf16
    x = jnp.transpose(x_nchw, (0, 2, 3, 1)).astype(ACT_DTYPE)
    x = conv_bn_relu(x, P["c1a"])                 # 149x149x32
    x = conv_bn_relu(x, P["c2a"])                 # 147x147x32
    x = conv_bn_relu(x, P["c2b"])                 # 147x147x64
    x = max_pool_3x3_s2(x)                        # 73x73x64
    x = conv_bn_relu(x, P["c3b"])                 # 73x73x80
    x = conv_bn_relu(x, P["c4a"])                 # 71x71x192
    x = max_pool_3x3_s2(x)                        # 35x35x192
    x = inception_a(P["m5b"], x)                  # 35x35x256
    x = inception_a(P["m5c"], x)                  # 35x35x288
    x = inception_a(P["m5d"], x)                  # 35x35x288
    x = inception_b(P["m6a"], x)                  # 17x17x768
    x = inception_c(P["m6b"], x)                  # 17x17x768
    x = inception_c(P["m6c"], x)                  # 17x17x768
    x = inception_c(P["m6d"], x)                  # 17x17x768
    x = inception_c(P["m6e"], x)                  # 17x17x768
    x = inception_d(P["m7a"], x)                  # 8x8x1280
    x = inception_e(P["m7b"], x)                  # 8x8x2048
    x = inception_e(P["m7c"], x)                  # 8x8x2048
    x = global_avg_pool(x)                        # (N, 2048) f32
    # TODO(synk): F.dropout follows self.training; identity in eval mode.
    return x                                      # (N, 2048)


if __name__ == "__main__":
    rng = np.random.default_rng(0)
    params = make_params(rng)
    # Inception v3 needs 299x299 spatial so the final avg_pool2d(8) is valid.
    x = jax.random.normal(jax.random.PRNGKey(0), (2, 3, 299, 299), dtype=jnp.float32)
    feats = forward(params, x)
    feats = jax.block_until_ready(feats)
    assert feats.shape == (2, 2048), feats.shape
    assert bool(jnp.all(jnp.isfinite(feats)))
    print("KERNEL_OK")
</pallas_src>

<mosaic_0001>
module attributes {stable_mosaic.version = 11 : i64} {
  func.func @_matmul_bias_relu_kernel(%arg0: i32, %arg1: memref<512x32xbf16, #tpu.memory_space<vmem>>, %arg2: memref<32x32xbf16, #tpu.memory_space<vmem>>, %arg3: memref<1x32xf32, #tpu.memory_space<vmem>>, %arg4: memref<512x32xbf16, #tpu.memory_space<vmem>>) attributes {dimension_semantics = [#tpu.dimension_semantics<parallel>], iteration_bounds = array<i64: 87>, scalar_prefetch = 0 : i64, scratch_operands = 0 : i64, tpu.core_type = #tpu.core_type<tc>, window_params = [{transform_indices = @transform_0, window_bounds = array<i64: 512, 32>}, {pipeline_mode = #tpu.pipeline_mode<synchronous>, transform_indices = @transform_1, window_bounds = array<i64: 32, 32>}, {pipeline_mode = #tpu.pipeline_mode<synchronous>, transform_indices = @transform_2, window_bounds = array<i64: 1, 32>}, {transform_indices = @transform_3, window_bounds = array<i64: 512, 32>}]} {
    %c0 = arith.constant 0 : index
    %c0_0 = arith.constant 0 : index
    %0 = vector.load %arg1[%c0, %c0_0] : memref<512x32xbf16, #tpu.memory_space<vmem>>, vector<512x32xbf16>
    %c0_1 = arith.constant 0 : index
    %c0_2 = arith.constant 0 : index
    %1 = vector.load %arg2[%c0_1, %c0_2] : memref<32x32xbf16, #tpu.memory_space<vmem>>, vector<32x32xbf16>
    %cst = arith.constant dense<0.000000e+00> : vector<512x32xf32>
    %2 = tpu.matmul %0, %1, %cst {dimension_numbers = #tpu.dot_dimension_numbers<[1], [0], [0], [1], [0, 0, 1, 1], [], []>} : vector<512x32xbf16>, vector<32x32xbf16>, vector<512x32xf32> -> vector<512x32xf32>
    %c0_3 = arith.constant 0 : index
    %c0_4 = arith.constant 0 : index
    %3 = vector.load %arg3[%c0_3, %c0_4] : memref<1x32xf32, #tpu.memory_space<vmem>>, vector<1x32xf32>
    %4 = vector.broadcast %3 : vector<1x32xf32> to vector<512x32xf32>
    %5 = arith.addf %2, %4 : vector<512x32xf32>
    %cst_5 = arith.constant 0.000000e+00 : f32
    %6 = vector.broadcast %cst_5 : f32 to vector<512x32xf32>
    %7 = arith.maximumf %5, %6 : vector<512x32xf32>
    %8 = arith.truncf %7 : vector<512x32xf32> to vector<512x32xbf16>
    %c0_6 = arith.constant 0 : index
    %c0_7 = arith.constant 0 : index
    %9 = vector.load %arg4[%c0_6, %c0_7] : memref<512x32xbf16, #tpu.memory_space<vmem>>, vector<512x32xbf16>
    tpu.vector_store %arg4[%c0_6, %c0_7], %8 {strides = array<i32>} : memref<512x32xbf16, #tpu.memory_space<vmem>>, vector<512x32xbf16>,
    return
  }
  func.func @transform_0(%arg0: i32) -> (i32, i32) {
    %c0_i32 = arith.constant 0 : i32
    %c0_i32_0 = arith.constant 0 : i32
    return %arg0, %c0_i32 : i32, i32
  }
  func.func @transform_1(%arg0: i32) -> (i32, i32) {
    %c0_i32 = arith.constant 0 : i32
    %c0_i32_0 = arith.constant 0 : i32
    %c0_i32_1 = arith.constant 0 : i32
    return %c0_i32, %c0_i32_0 : i32, i32
  }
  func.func @transform_2(%arg0: i32) -> (i32, i32) {
    %c0_i32 = arith.constant 0 : i32
    %c0_i32_0 = arith.constant 0 : i32
    %c0_i32_1 = arith.constant 0 : i32
    return %c0_i32, %c0_i32_0 : i32, i32
  }
  func.func @transform_3(%arg0: i32) -> (i32, i32) {
    %c0_i32 = arith.constant 0 : i32
    %c0_i32_0 = arith.constant 0 : i32
    return %arg0, %c0_i32 : i32, i32
  }
}

</mosaic_0001>

<llo_original>
// kernel: tpu_custom_call.1
$region0: #{tpu_custom_call.1}
  #allocation0 [shape = 'u32[]', space=smem, size = 0x4, offset = 0x4, fixed_abs, tag = 'smem constant byte address 0x4 - core index']
  #allocation1 [shape = 'u32[144,128]{1,0:T(1,128)}', space=vmem, size = 0x12000, scoped, tag = 'internal scratch']
  %s0 = inlined_call_operand.vmem [shape: bf16[44544,32], index: 0, kind: input, shape index: {}]
  %s1 = inlined_call_operand.vmem [shape: bf16[32,32], index: 1, kind: input, shape index: {}]
  %s2 = inlined_call_operand.vmem [shape: f32[1,32], index: 2, kind: input, shape index: {}]
  %s3 = inlined_call_operand.vmem [shape: bf16[44544,32], index: 3, kind: output, shape index: {}]
  %s4 = sld [smem:[#allocation0]]
  $region45: #{tpu_custom_call.1} parent=0
    _
  %s6 = ssub.s32 1, %s4
  %s7 = scalar_select 0, %s6, %s4
  loop: start=0, step=1, limit=89
  $region2: #{tpu_custom_call.1} parent=0 // loop_pre_header
    _
  $region3: #{tpu_custom_call.1} parent=0 // loop_header
    %s9 = sphi 0, %s13
    %p10 = scmp.ge.s32.totalorder %s9, 89
    %s19 = sphi 0, %s21
    %s22 = sphi 0, %s19
    %s23 = sphi 0, %s22
    %s39 = sphi 0, %s23
    %s43 = sphi 0, %s43
    %s45 = sphi 0, %s43
    %s46 = sphi 0, %s45
    %s60 = sphi 0, %s46
    %s64 = sphi 0, %s64
    %s66 = sphi 0, %s64
    %s67 = sphi 0, %s66
    %s81 = sphi 0, %s67
    %s87 = sphi 0, %s89
    %s90 = sphi 0, %s87
    %s91 = sphi 0, %s90
    %s107 = sphi 0, %s91
  $region4: #{tpu_custom_call.1} parent=0 // loop_header_branch
    %12 = sbr.rel (%p10) target = $region8
  $region5: #{tpu_custom_call.1} parent=0 // loop_body
    %s14 = ssub.s32 %s9, 1
    %s15 = ssub.s32 %s9, 2
    %s16 = sadd.s32 %s9, 1
    %s17 = ssub.s32 %s9, %s16
    %p18 = scmp.eq.s32.totalorder %s17, 0
    %s20 = sadd.s32 %s19, 1
    %s21 = scalar_select %p18, %s19, %s20
    %p24 = pneg %p18
    %p25 = scmp.eq.s32.totalorder %s9, 86
    %p26 = por %p24, %p25
    %p27 = scmp.ne.s32.totalorder %s19, %s22
    %p28 = scmp.eq.s32.totalorder %s9, 0
    %p29 = por %p27, %p28
    %p30 = scmp.ne.s32.totalorder %s19, %s22
    %p31 = scmp.eq.s32.totalorder %s14, 86
    %p32 = por %p30, %p31
    %p33 = scmp.ne.s32.totalorder %s22, %s23
    %p34 = scmp.eq.s32.totalorder %s14, 0
    %p35 = por %p33, %p34
    %p36 = scmp.ne.s32.totalorder %s22, %s23
    %p37 = scmp.eq.s32.totalorder %s15, 86
    %p38 = por %p36, %p37
    %p40 = scmp.ne.s32.totalorder %s23, %s39
    %p41 = scmp.eq.s32.totalorder %s15, 0
    %p42 = por %p40, %p41
    %s44 = sadd.s32 %s43, 1
    %p47 = scmp.eq.s32.totalorder %s9, 86
    %p48 = scmp.ne.s32.totalorder %s43, %s45
    %p49 = scmp.eq.s32.totalorder %s9, 0
    %p50 = por %p48, %p49
    %p51 = scmp.ne.s32.totalorder %s43, %s45
    %p52 = scmp.eq.s32.totalorder %s14, 86
    %p53 = por %p51, %p52
    %p54 = scmp.ne.s32.totalorder %s45, %s46
    %p55 = scmp.eq.s32.totalorder %s14, 0
    %p56 = por %p54, %p55
    %p57 = scmp.ne.s32.totalorder %s45, %s46
    %p58 = scmp.eq.s32.totalorder %s15, 86
    %p59 = por %p57, %p58
    %p61 = scmp.ne.s32.totalorder %s46, %s60
    %p62 = scmp.eq.s32.totalorder %s15, 0
    %p63 = por %p61, %p62
    %s65 = sadd.s32 %s64, 1
    %p68 = scmp.eq.s32.totalorder %s9, 86
    %p69 = scmp.ne.s32.totalorder %s64, %s66
    %p70 = scmp.eq.s32.totalorder %s9, 0
    %p71 = por %p69, %p70
    %p72 = scmp.ne.s32.totalorder %s64, %s66
    %p73 = scmp.eq.s32.totalorder %s14, 86
    %p74 = por %p72, %p73
    %p75 = scmp.ne.s32.totalorder %s66, %s67
    %p76 = scmp.eq.s32.totalorder %s14, 0
    %p77 = por %p75, %p76
    %p78 = scmp.ne.s32.totalorder %s66, %s67
    %p79 = scmp.eq.s32.totalorder %s15, 86
    %p80 = por %p78, %p79
    %p82 = scmp.ne.s32.totalorder %s67, %s81
    %p83 = scmp.eq.s32.totalorder %s15, 0
    %p84 = por %p82, %p83
    %s85 = ssub.s32 %s9, %s16
    %p86 = scmp.eq.s32.totalorder %s85, 0
    %s88 = sadd.s32 %s87, 1
    %s89 = scalar_select %p86, %s87, %s88
    %p92 = pneg %p86
    %p93 = scmp.eq.s32.totalorder %s9, 86
    %p94 = por %p92, %p93
    %p95 = scmp.ne.s32.totalorder %s87, %s90
    %p96 = scmp.eq.s32.totalorder %s9, 0
    %p97 = por %p95, %p96
    %p98 = scmp.ne.s32.totalorder %s87, %s90
    %p99 = scmp.eq.s32.totalorder %s14, 86
    %p100 = por %p98, %p99
    %p101 = scmp.ne.s32.totalorder %s90, %s91
    %p102 = scmp.eq.s32.totalorder %s14, 0
    %p103 = por %p101, %p102
    %p104 = scmp.ne.s32.totalorder %s90, %s91
    %p105 = scmp.eq.s32.totalorder %s15, 86
    %p106 = por %p104, %p105
    %p108 = scmp.ne.s32.totalorder %s91, %s107
    %p109 = scmp.eq.s32.totalorder %s15, 0
    %p110 = por %p108, %p109
    %p111 = scmp.le.s32.totalorder 1, %s9
    %p112 = scmp.lt.s32.totalorder %s9, 88
    %p113 = pnand %p111, %p112
    %p114 = pneg %p113
    // Predicated region
    $region9: #{tpu_custom_call.1} parent=5 // pred_check
      _
    $region10: #{tpu_custom_call.1} parent=5 // pred_check_branch
      %116 = sbr.rel (%p113) target = $region12
    $region11: #{tpu_custom_call.1} parent=5 // pred_region
      %s117 = ssub.s32 %s9, 1
      // Predicated region
      $region13: #{tpu_custom_call.1} parent=11 // pred_check
        %p118 = pneg %p56
      $region14: #{tpu_custom_call.1} parent=11 // pred_check_branch
        %120 = sbr.rel (%p118) target = $region16
      $region15: #{tpu_custom_call.1} parent=11 // pred_region
        _
      $region16: #{tpu_custom_call.1} parent=11 // pred_fallthru
        _
      // Predicated region
      $region17: #{tpu_custom_call.1} parent=11 // pred_check
        %p121 = pneg %p77
      $region18: #{tpu_custom_call.1} parent=11 // pred_check_branch
        %123 = sbr.rel (%p121) target = $region20
      $region19: #{tpu_custom_call.1} parent=11 // pred_region
        _
      $region20: #{tpu_custom_call.1} parent=11 // pred_fallthru
        _
    $region12: #{tpu_custom_call.1} parent=5 // pred_fallthru
      _
    %p124 = scmp.lt.s32.totalorder %s9, 87
    // Predicated region
    $region21: #{tpu_custom_call.1} parent=5 // pred_check
      %p125 = pneg %p124
    $region22: #{tpu_custom_call.1} parent=5 // pred_check_branch
      %127 = sbr.rel (%p125) target = $region24
    $region23: #{tpu_custom_call.1} parent=5 // pred_region
      // Predicated region
      $region25: #{tpu_custom_call.1} parent=23 // pred_check
        %p128 = pneg %p29
      $region26: #{tpu_custom_call.1} parent=23 // pred_check_branch
        %130 = sbr.rel (%p128) target = $region28
      $region27: #{tpu_custom_call.1} parent=23 // pred_region
        %s131 = smul.u32 64, %s9
        %p132 = scmp.lt.s32.totalorder %s131, 5567
        %s133 = scalar_select %p132, %s131, 5567
        %s134 = smul.addr %s133, 4
        %s135 = scalar_lea.vmem %s0, %s134
        %s136 = smul.u32 64, %s9
      $region28: #{tpu_custom_call.1} parent=23 // pred_fallthru
        _
    $region24: #{tpu_custom_call.1} parent=5 // pred_fallthru
      _
    %p137 = scmp.le.s32.totalorder 1, %s9
    %p138 = scmp.lt.s32.totalorder %s9, 88
    %p139 = pnand %p137, %p138
    %p140 = pneg %p139
    // Predicated region
    $region29: #{tpu_custom_call.1} parent=5 // pred_check
      _
    $region30: #{tpu_custom_call.1} parent=5 // pred_check_branch
      %142 = sbr.rel (%p139) target = $region32
    $region31: #{tpu_custom_call.1} parent=5 // pred_region
      %s143 = ssub.s32 %s9, 1
      %s144 = smul.u32 64, %s14
      %p145 = scmp.lt.s32.totalorder %s144, 5567
      %s146 = scalar_select %p145, %s144, 5567
      %s147 = smul.addr %s146, 4
      %s148 = scalar_lea.vmem %s0, %s147
      %p149 = pneg %p35
      %p150 = pneg %p32
      %p151 = pneg %p56
      %p152 = pneg %p53
      %p153 = pneg %p77
      %p154 = pneg %p74
      %p155 = pneg %p103
      %p156 = pneg %p100
      %s157 = smul.u32 64, %s14
      %p158 = scmp.lt.s32.totalorder %s157, 5567
      %s159 = scalar_select %p158, %s157, 5567
      %s160 = smul.addr %s159, 4
      %s161 = scalar_lea.vmem %s3, %s160
      %s162 = smul.u32 64, %s14
      %p163 = scmp.lt.s32.totalorder %s162, 5567
      %s164 = scalar_select %p163, %s162, 5567
      %s165 = smul.addr %s164, 4
      %s166 = scalar_lea.vmem %s0, %s165
      %s167 = smul.u32 64, %s14
      %s168 = smul.u32 64, %s14
      %p169 = scmp.lt.s32.totalorder %s168, 5567
      %s170 = scalar_select %p169, %s168, 5567
      %s171 = smul.addr %s170, 4
      %s172 = scalar_lea.vmem %s3, %s171
      %s173 = smul.u32 64, %s14
      %v175 = vld [vmem:[%s166] sm:$0xf]
      %v176 = vld [vmem:[%s166 + $0x4] sm:$0xf]
      %v177 = vld [vmem:[%s166 + $0x8] sm:$0xf]
      %v178 = vld [vmem:[%s166 + $0xc] sm:$0xf]
      %v179 = vld [vmem:[%s166 + $0x10] sm:$0xf]
      %v180 = vld [vmem:[%s166 + $0x14] sm:$0xf]
      %v181 = vld [vmem:[%s166 + $0x18] sm:$0xf]
      %v182 = vld [vmem:[%s166 + $0x1c] sm:$0xf]
      %v183 = vld [vmem:[%s166 + $0x20] sm:$0xf]
      %v184 = vld [vmem:[%s166 + $0x24] sm:$0xf]
      %v185 = vld [vmem:[%s166 + $0x28] sm:$0xf]
      %v186 = vld [vmem:[%s166 + $0x2c] sm:$0xf]
      %v187 = vld [vmem:[%s166 + $0x30] sm:$0xf]
      %v188 = vld [vmem:[%s166 + $0x34] sm:$0xf]
      %v189 = vld [vmem:[%s166 + $0x38] sm:$0xf]
      %v190 = vld [vmem:[%s166 + $0x3c] sm:$0xf]
      %v191 = vld [vmem:[%s166 + $0x40] sm:$0xf]
      %v192 = vld [vmem:[%s166 + $0x44] sm:$0xf]
      %v193 = vld [vmem:[%s166 + $0x48] sm:$0xf]
      %v194 = vld [vmem:[%s166 + $0x4c] sm:$0xf]
      %v195 = vld [vmem:[%s166 + $0x50] sm:$0xf]
      %v196 = vld [vmem:[%s166 + $0x54] sm:$0xf]
      %v197 = vld [vmem:[%s166 + $0x58] sm:$0xf]
      %v198 = vld [vmem:[%s166 + $0x5c] sm:$0xf]
      %v199 = vld [vmem:[%s166 + $0x60] sm:$0xf]
      %v200 = vld [vmem:[%s166 + $0x64] sm:$0xf]
      %v201 = vld [vmem:[%s166 + $0x68] sm:$0xf]
      %v202 = vld [vmem:[%s166 + $0x6c] sm:$0xf]
      %v203 = vld [vmem:[%s166 + $0x70] sm:$0xf]
      %v204 = vld [vmem:[%s166 + $0x74] sm:$0xf]
      %v205 = vld [vmem:[%s166 + $0x78] sm:$0xf]
      %v206 = vld [vmem:[%s166 + $0x7c] sm:$0xf]
      %v207 = vld [vmem:[%s166 + $0x80] sm:$0xf]
      %v208 = vld [vmem:[%s166 + $0x84] sm:$0xf]
      %v209 = vld [vmem:[%s166 + $0x88] sm:$0xf]
      %v210 = vld [vmem:[%s166 + $0x8c] sm:$0xf]
      %v211 = vld [vmem:[%s166 + $0x90] sm:$0xf]
      %v212 = vld [vmem:[%s166 + $0x94] sm:$0xf]
      %v213 = vld [vmem:[%s166 + $0x98] sm:$0xf]
      %v214 = vld [vmem:[%s166 + $0x9c] sm:$0xf]
      %v215 = vld [vmem:[%s166 + $0xa0] sm:$0xf]
      %v216 = vld [vmem:[%s166 + $0xa4] sm:$0xf]
      %v217 = vld [vmem:[%s166 + $0xa8] sm:$0xf]
      %v218 = vld [vmem:[%s166 + $0xac] sm:$0xf]
      %v219 = vld [vmem:[%s166 + $0xb0] sm:$0xf]
      %v220 = vld [vmem:[%s166 + $0xb4] sm:$0xf]
      %v221 = vld [vmem:[%s166 + $0xb8] sm:$0xf]
      %v222 = vld [vmem:[%s166 + $0xbc] sm:$0xf]
      %v223 = vld [vmem:[%s166 + $0xc0] sm:$0xf]
      %v224 = vld [vmem:[%s166 + $0xc4] sm:$0xf]
      %v225 = vld [vmem:[%s166 + $0xc8] sm:$0xf]
      %v226 = vld [vmem:[%s166 + $0xcc] sm:$0xf]
      %v227 = vld [vmem:[%s166 + $0xd0] sm:$0xf]
      %v228 = vld [vmem:[%s166 + $0xd4] sm:$0xf]
      %v229 = vld [vmem:[%s166 + $0xd8] sm:$0xf]
      %v230 = vld [vmem:[%s166 + $0xdc] sm:$0xf]
      %v231 = vld [vmem:[%s166 + $0xe0] sm:$0xf]
      %v232 = vld [vmem:[%s166 + $0xe4] sm:$0xf]
      %v233 = vld [vmem:[%s166 + $0xe8] sm:$0xf]
      %v234 = vld [vmem:[%s166 + $0xec] sm:$0xf]
      %v235 = vld [vmem:[%s166 + $0xf0] sm:$0xf]
      %v236 = vld [vmem:[%s166 + $0xf4] sm:$0xf]
      %v237 = vld [vmem:[%s166 + $0xf8] sm:$0xf]
      %v238 = vld [vmem:[%s166 + $0xfc] sm:$0xf]
      %v239 = vld [vmem:[%s1] sm:$0xf]
      %v240 = vld [vmem:[%s1 + $0x4] sm:$0xf]
      %v241 = vld [vmem:[%s1 + $0x8] sm:$0xf]
      %v242 = vld [vmem:[%s1 + $0xc] sm:$0xf]
      %v243 = vld [vmem:[%s2] sm:$0x1]
      %v245 = vlaneseq
      %v246 = vshrl.u32 %v245, 7
      %v247 = vsub.s32 0, %v246
      %v248 = vrot.slane %v243, %v247
      %v314 = vunpack.c.l.b16 %v175
      %v315 = vunpack.c.l.b16 %v176
      %v316 = vunpack.c.l.b16 %v177
      %v317 = vunpack.c.l.b16 %v178
      %v318 = vunpack.c.l.b16 %v179
      %v319 = vunpack.c.l.b16 %v180
      %v320 = vunpack.c.l.b16 %v181
      %v321 = vunpack.c.l.b16 %v182
      %v322 = vunpack.c.l.b16 %v183
      %v323 = vunpack.c.l.b16 %v184
      %v324 = vunpack.c.l.b16 %v185
      %v325 = vunpack.c.l.b16 %v186
      %v326 = vunpack.c.l.b16 %v187
      %v327 = vunpack.c.l.b16 %v188
      %v328 = vunpack.c.l.b16 %v189
      %v329 = vunpack.c.l.b16 %v190
      %v330 = vunpack.c.l.b16 %v191
      %v331 = vunpack.c.l.b16 %v192
      %v332 = vunpack.c.l.b16 %v193
      %v333 = vunpack.c.l.b16 %v194
      %v334 = vunpack.c.l.b16 %v195
      %v335 = vunpack.c.l.b16 %v196
      %v336 = vunpack.c.l.b16 %v197
      %v337 = vunpack.c.l.b16 %v198
      %v338 = vunpack.c.l.b16 %v199
      %v339 = vunpack.c.l.b16 %v200
      %v340 = vunpack.c.l.b16 %v201
      %v341 = vunpack.c.l.b16 %v202
      %v342 = vunpack.c.l.b16 %v203
      %v343 = vunpack.c.l.b16 %v204
      %v344 = vunpack.c.l.b16 %v205
      %v345 = vunpack.c.l.b16 %v206
      %v346 = vunpack.c.l.b16 %v207
      %v347 = vunpack.c.l.b16 %v208
      %v348 = vunpack.c.l.b16 %v209
      %v349 = vunpack.c.l.b16 %v210
      %v350 = vunpack.c.l.b16 %v211
      %v351 = vunpack.c.l.b16 %v212
      %v352 = vunpack.c.l.b16 %v213
      %v353 = vunpack.c.l.b16 %v214
      %v354 = vunpack.c.l.b16 %v215
      %v355 = vunpack.c.l.b16 %v216
      %v356 = vunpack.c.l.b16 %v217
      %v357 = vunpack.c.l.b16 %v218
      %v358 = vunpack.c.l.b16 %v219
      %v359 = vunpack.c.l.b16 %v220
      %v360 = vunpack.c.l.b16 %v221
      %v361 = vunpack.c.l.b16 %v222
      %v362 = vunpack.c.l.b16 %v223
      %v363 = vunpack.c.l.b16 %v224
      %v364 = vunpack.c.l.b16 %v225
      %v365 = vunpack.c.l.b16 %v226
      %v366 = vunpack.c.l.b16 %v227
      %v367 = vunpack.c.l.b16 %v228
      %v368 = vunpack.c.l.b16 %v229
      %v369 = vunpack.c.l.b16 %v230
      %v370 = vunpack.c.l.b16 %v231
      %v371 = vunpack.c.l.b16 %v232
      %v372 = vunpack.c.l.b16 %v233
      %v373 = vunpack.c.l.b16 %v234
      %v374 = vunpack.c.l.b16 %v235
      %v375 = vunpack.c.l.b16 %v236
      %v376 = vunpack.c.l.b16 %v237
      %v377 = vunpack.c.l.b16 %v238
      %v378 = vpack.c.b16 %v315, %v314
      %v379 = vpack.c.b16 %v317, %v316
      %v380 = vpack.c.b16 %v319, %v318
      %v381 = vpack.c.b16 %v321, %v320
      %v382 = vpack.c.b16 %v323, %v322
      %v383 = vpack.c.b16 %v325, %v324
      %v384 = vpack.c.b16 %v327, %v326
      %v385 = vpack.c.b16 %v329, %v328
      %v386 = vpack.c.b16 %v331, %v330
      %v387 = vpack.c.b16 %v333, %v332
      %v388 = vpack.c.b16 %v335, %v334
      %v389 = vpack.c.b16 %v337, %v336
      %v390 = vpack.c.b16 %v339, %v338
      %v391 = vpack.c.b16 %v341, %v340
      %v392 = vpack.c.b16 %v343, %v342
      %v393 = vpack.c.b16 %v345, %v344
      %v394 = vpack.c.b16 %v347, %v346
      %v395 = vpack.c.b16 %v349, %v348
      %v396 = vpack.c.b16 %v351, %v350
      %v397 = vpack.c.b16 %v353, %v352
      %v398 = vpack.c.b16 %v355, %v354
      %v399 = vpack.c.b16 %v357, %v356
      %v400 = vpack.c.b16 %v359, %v358
      %v401 = vpack.c.b16 %v361, %v360
      %v402 = vpack.c.b16 %v363, %v362
      %v403 = vpack.c.b16 %v365, %v364
      %v404 = vpack.c.b16 %v367, %v366
      %v405 = vpack.c.b16 %v369, %v368
      %v406 = vpack.c.b16 %v371, %v370
      %v407 = vpack.c.b16 %v373, %v372
      %v408 = vpack.c.b16 %v375, %v374
      %v409 = vpack.c.b16 %v377, %v376
      %v414 = vunpack.c.l.b16 %v239
      %v415 = vunpack.c.l.b16 %v240
      %v416 = vunpack.c.l.b16 %v241
      %v417 = vunpack.c.l.b16 %v242
      %v418 = vpack.c.b16 %v415, %v414
      %v419 = vpack.c.b16 %v417, %v416
      %vm422 = vcmask 261120
      %v424 = vsel %vm422, %v378, 0
      %v427 = vsel %vm422, %v379, 0
      %v430 = vsel %vm422, %v380, 0
      %v433 = vsel %vm422, %v381, 0
      %v436 = vsel %vm422, %v382, 0
      %v439 = vsel %vm422, %v383, 0
      %v442 = vsel %vm422, %v384, 0
      %v445 = vsel %vm422, %v385, 0
      %v448 = vsel %vm422, %v386, 0
      %v451 = vsel %vm422, %v387, 0
      %v454 = vsel %vm422, %v388, 0
      %v457 = vsel %vm422, %v389, 0
      %v460 = vsel %vm422, %v390, 0
      %v463 = vsel %vm422, %v391, 0
      %v466 = vsel %vm422, %v392, 0
      %v469 = vsel %vm422, %v393, 0
      %v472 = vsel %vm422, %v394, 0
      %v475 = vsel %vm422, %v395, 0
      %v478 = vsel %vm422, %v396, 0
      %v481 = vsel %vm422, %v397, 0
      %v484 = vsel %vm422, %v398, 0
      %v487 = vsel %vm422, %v399, 0
      %v490 = vsel %vm422, %v400, 0
      %v493 = vsel %vm422, %v401, 0
      %v496 = vsel %vm422, %v402, 0
      %v499 = vsel %vm422, %v403, 0
      %v502 = vsel %vm422, %v404, 0
      %v505 = vsel %vm422, %v405, 0
      %v508 = vsel %vm422, %v406, 0
      %v511 = vsel %vm422, %v407, 0
      %v514 = vsel %vm422, %v408, 0
      %v517 = vsel %vm422, %v409, 0
      %519 = vmatprep.subr.bf16.mxu0 0
      %520 = vmatpush1.bf16.msra.mxu0 0
      %521 = vmatprep.subr.bf16.mxu0 0
      %522 = vmatpush1.bf16.msra.mxu0 0
      %523 = vmatprep.subr.bf16.mxu0 0
      %524 = vmatpush1.bf16.msra.mxu0 0
      %525 = vmatprep.subr.bf16.mxu0 0
      %526 = vmatpush1.bf16.msra.mxu0 0
      %527 = vmatprep.subr.bf16.mxu0 0
      %528 = vmatpush1.bf16.msra.mxu0 0
      %529 = vmatprep.subr.bf16.mxu0 0
      %530 = vmatpush1.bf16.msra.mxu0 0
      %531 = vmatprep.subr.bf16.mxu0 0
      %532 = vmatpush1.bf16.msra.mxu0 %v419
      %533 = vmatprep.subr.bf16.mxu0 0
      %534 = vmatpush1.bf16.msra.mxu0 %v418
      %535 = vmatprep.subr.bf16.mxu0 0
      %536 = vmatpush2.bf16.msra.mxu0 0
      %537 = vmatprep.subr.bf16.mxu0 0
      %538 = vmatpush2.bf16.msra.mxu0 0
      %539 = vmatprep.subr.bf16.mxu0 0
      %540 = vmatpush2.bf16.msra.mxu0 0
      %541 = vmatprep.subr.bf16.mxu0 0
      %542 = vmatpush2.bf16.msra.mxu0 0
      %543 = vmatprep.subr.bf16.mxu0 0
      %544 = vmatpush2.bf16.msra.mxu0 0
      %545 = vmatprep.subr.bf16.mxu0 0
      %546 = vmatpush2.bf16.msra.mxu0 0
      %547 = vmatprep.subr.bf16.mxu0 0
      %548 = vmatpush2.bf16.msra.mxu0 0
      %549 = vmatprep.subr.bf16.mxu0 0
      %550 = vmatpush2.bf16.msra.mxu0 0
      %551 = vmatprep.mubr.bf16.mxu0 0
      %552 = vmatmul.mubr.bf16.gmra.mxu0 %v424
      %v553 = vpop.f32.mrf.mxu0
      %v554 = vadd.f32 %v248, %v553
      %v555 = vpop.f32.mrf.mxu0
      %v556 = vpop.f32.mrf.mxu0
      %v557 = vadd.f32 %v248, %v556
      %v558 = vpop.f32.mrf.mxu0
      %559 = vmatprep.mubr.bf16.mxu0 0
      %560 = vmatmul.mubr.bf16.gmra.mxu0 %v427
      %v561 = vpop.f32.mrf.mxu0
      %v562 = vadd.f32 %v248, %v561
      %v563 = vpop.f32.mrf.mxu0
      %v564 = vpop.f32.mrf.mxu0
      %v565 = vadd.f32 %v248, %v564
      %v566 = vpop.f32.mrf.mxu0
      %567 = vmatprep.mubr.bf16.mxu0 0
      %568 = vmatmul.mubr.bf16.gmra.mxu0 %v430
      %v569 = vpop.f32.mrf.mxu0
      %v570 = vadd.f32 %v248, %v569
      %v571 = vpop.f32.mrf.mxu0
      %v572 = vpop.f32.mrf.mxu0
      %v573 = vadd.f32 %v248, %v572
      %v574 = vpop.f32.mrf.mxu0
      %575 = vmatprep.mubr.bf16.mxu0 0
      %576 = vmatmul.mubr.bf16.gmra.mxu0 %v433
      %v577 = vpop.f32.mrf.mxu0
      %v578 = vadd.f32 %v248, %v577
      %v579 = vpop.f32.mrf.mxu0
      %v580 = vpop.f32.mrf.mxu0
      %v581 = vadd.f32 %v248, %v580
      %v582 = vpop.f32.mrf.mxu0
      %583 = vmatprep.mubr.bf16.mxu0 0
      %584 = vmatmul.mubr.bf16.gmra.mxu0 %v436
      %v585 = vpop.f32.mrf.mxu0
      %v586 = vadd.f32 %v248, %v585
      %v587 = vpop.f32.mrf.mxu0
      %v588 = vpop.f32.mrf.mxu0
      %v589 = vadd.f32 %v248, %v588
      %v590 = vpop.f32.mrf.mxu0
      %591 = vmatprep.mubr.bf16.mxu0 0
      %592 = vmatmul.mubr.bf16.gmra.mxu0 %v439
      %v593 = vpop.f32.mrf.mxu0
      %v594 = vadd.f32 %v248, %v593
      %v595 = vpop.f32.mrf.mxu0
      %v596 = vpop.f32.mrf.mxu0
      %v597 = vadd.f32 %v248, %v596
      %v598 = vpop.f32.mrf.mxu0
      %599 = vmatprep.mubr.bf16.mxu0 0
      %600 = vmatmul.mubr.bf16.gmra.mxu0 %v442
      %v601 = vpop.f32.mrf.mxu0
      %v602 = vadd.f32 %v248, %v601
      %v603 = vpop.f32.mrf.mxu0
      %v604 = vpop.f32.mrf.mxu0
      %v605 = vadd.f32 %v248, %v604
      %v606 = vpop.f32.mrf.mxu0
      %607 = vmatprep.mubr.bf16.mxu0 0
      %608 = vmatmul.mubr.bf16.gmra.mxu0 %v445
      %v609 = vpop.f32.mrf.mxu0
      %v610 = vadd.f32 %v248, %v609
      %v611 = vpop.f32.mrf.mxu0
      %v612 = vpop.f32.mrf.mxu0
      %v613 = vadd.f32 %v248, %v612
      %v614 = vpop.f32.mrf.mxu0
      %615 = vmatprep.mubr.bf16.mxu0 0
      %616 = vmatmul.mubr.bf16.gmra.mxu0 %v448
      %v617 = vpop.f32.mrf.mxu0
      %v618 = vadd.f32 %v248, %v617
      %v619 = vpop.f32.mrf.mxu0
      %v620 = vpop.f32.mrf.mxu0
      %v621 = vadd.f32 %v248, %v620
      %v622 = vpop.f32.mrf.mxu0
      %623 = vmatprep.mubr.bf16.mxu0 0
      %624 = vmatmul.mubr.bf16.gmra.mxu0 %v451
      %v625 = vpop.f32.mrf.mxu0
      %v626 = vadd.f32 %v248, %v625
      %v627 = vpop.f32.mrf.mxu0
      %v628 = vpop.f32.mrf.mxu0
      %v629 = vadd.f32 %v248, %v628
      %v630 = vpop.f32.mrf.mxu0
      %631 = vmatprep.mubr.bf16.mxu0 0
      %632 = vmatmul.mubr.bf16.gmra.mxu0 %v454
      %v633 = vpop.f32.mrf.mxu0
      %v634 = vadd.f32 %v248, %v633
      %v635 = vpop.f32.mrf.mxu0
      %v636 = vpop.f32.mrf.mxu0
      %v637 = vadd.f32 %v248, %v636
      %v638 = vpop.f32.mrf.mxu0
      %639 = vmatprep.mubr.bf16.mxu0 0
      %640 = vmatmul.mubr.bf16.gmra.mxu0 %v457
      %v641 = vpop.f32.mrf.mxu0
      %v642 = vadd.f32 %v248, %v641
      %v643 = vpop.f32.mrf.mxu0
      %v644 = vpop.f32.mrf.mxu0
      %v645 = vadd.f32 %v248, %v644
      %v646 = vpop.f32.mrf.mxu0
      %647 = vmatprep.mubr.bf16.mxu0 0
      %648 = vmatmul.mubr.bf16.gmra.mxu0 %v460
      %v649 = vpop.f32.mrf.mxu0
      %v650 = vadd.f32 %v248, %v649
      %v651 = vpop.f32.mrf.mxu0
      %v652 = vpop.f32.mrf.mxu0
      %v653 = vadd.f32 %v248, %v652
      %v654 = vpop.f32.mrf.mxu0
      %655 = vmatprep.mubr.bf16.mxu0 0
      %656 = vmatmul.mubr.bf16.gmra.mxu0 %v463
      %v657 = vpop.f32.mrf.mxu0
      %v658 = vadd.f32 %v248, %v657
      %v659 = vpop.f32.mrf.mxu0
      %v660 = vpop.f32.mrf.mxu0
      %v661 = vadd.f32 %v248, %v660
      %v662 = vpop.f32.mrf.mxu0
      %663 = vmatprep.mubr.bf16.mxu0 0
      %664 = vmatmul.mubr.bf16.gmra.mxu0 %v466
      %v665 = vpop.f32.mrf.mxu0
      %v666 = vadd.f32 %v248, %v665
      %v667 = vpop.f32.mrf.mxu0
      %v668 = vpop.f32.mrf.mxu0
      %v669 = vadd.f32 %v248, %v668
      %v670 = vpop.f32.mrf.mxu0
      %671 = vmatprep.mubr.bf16.mxu0 0
      %672 = vmatmul.mubr.bf16.gmra.mxu0 %v469
      %v673 = vpop.f32.mrf.mxu0
      %v674 = vadd.f32 %v248, %v673
      %v675 = vpop.f32.mrf.mxu0
      %v676 = vpop.f32.mrf.mxu0
      %v677 = vadd.f32 %v248, %v676
      %v678 = vpop.f32.mrf.mxu0
      %679 = vmatprep.mubr.bf16.mxu0 0
      %680 = vmatmul.mubr.bf16.gmra.mxu0 %v472
      %v681 = vpop.f32.mrf.mxu0
      %v682 = vadd.f32 %v248, %v681
      %v683 = vpop.f32.mrf.mxu0
      %v684 = vpop.f32.mrf.mxu0
      %v685 = vadd.f32 %v248, %v684
      %v686 = vpop.f32.mrf.mxu0
      %687 = vmatprep.mubr.bf16.mxu0 0
      %688 = vmatmul.mubr.bf16.gmra.mxu0 %v475
      %v689 = vpop.f32.mrf.mxu0
      %v690 = vadd.f32 %v248, %v689
      %v691 = vpop.f32.mrf.mxu0
      %v692 = vpop.f32.mrf.mxu0
      %v693 = vadd.f32 %v248, %v692
      %v694 = vpop.f32.mrf.mxu0
      %695 = vmatprep.mubr.bf16.mxu0 0
      %696 = vmatmul.mubr.bf16.gmra.mxu0 %v478
      %v697 = vpop.f32.mrf.mxu0
      %v698 = vadd.f32 %v248, %v697
      %v699 = vpop.f32.mrf.mxu0
      %v700 = vpop.f32.mrf.mxu0
      %v701 = vadd.f32 %v248, %v700
      %v702 = vpop.f32.mrf.mxu0
      %703 = vmatprep.mubr.bf16.mxu0 0
      %704 = vmatmul.mubr.bf16.gmra.mxu0 %v481
      %v705 = vpop.f32.mrf.mxu0
      %v706 = vadd.f32 %v248, %v705
      %v707 = vpop.f32.mrf.mxu0
      %v708 = vpop.f32.mrf.mxu0
      %v709 = vadd.f32 %v248, %v708
      %v710 = vpop.f32.mrf.mxu0
      %711 = vmatprep.mubr.bf16.mxu0 0
      %712 = vmatmul.mubr.bf16.gmra.mxu0 %v484
      %v713 = vpop.f32.mrf.mxu0
      %v714 = vadd.f32 %v248, %v713
      %v715 = vpop.f32.mrf.mxu0
      %v716 = vpop.f32.mrf.mxu0
      %v717 = vadd.f32 %v248, %v716
      %v718 = vpop.f32.mrf.mxu0
      %719 = vmatprep.mubr.bf16.mxu0 0
      %720 = vmatmul.mubr.bf16.gmra.mxu0 %v487
      %v721 = vpop.f32.mrf.mxu0
      %v722 = vadd.f32 %v248, %v721
      %v723 = vpop.f32.mrf.mxu0
      %v724 = vpop.f32.mrf.mxu0
      %v725 = vadd.f32 %v248, %v724
      %v726 = vpop.f32.mrf.mxu0
      %727 = vmatprep.mubr.bf16.mxu0 0
      %728 = vmatmul.mubr.bf16.gmra.mxu0 %v490
      %v729 = vpop.f32.mrf.mxu0
      %v730 = vadd.f32 %v248, %v729
      %v731 = vpop.f32.mrf.mxu0
      %v732 = vpop.f32.mrf.mxu0
      %v733 = vadd.f32 %v248, %v732
      %v734 = vpop.f32.mrf.mxu0
      %735 = vmatprep.mubr.bf16.mxu0 0
      %736 = vmatmul.mubr.bf16.gmra.mxu0 %v493
      %v737 = vpop.f32.mrf.mxu0
      %v738 = vadd.f32 %v248, %v737
      %v739 = vpop.f32.mrf.mxu0
      %v740 = vpop.f32.mrf.mxu0
      %v741 = vadd.f32 %v248, %v740
      %v742 = vpop.f32.mrf.mxu0
      %743 = vmatprep.mubr.bf16.mxu0 0
      %744 = vmatmul.mubr.bf16.gmra.mxu0 %v496
      %v745 = vpop.f32.mrf.mxu0
      %v746 = vadd.f32 %v248, %v745
      %v747 = vpop.f32.mrf.mxu0
      %v748 = vpop.f32.mrf.mxu0
      %v749 = vadd.f32 %v248, %v748
      %v750 = vpop.f32.mrf.mxu0
      %751 = vmatprep.mubr.bf16.mxu0 0
      %752 = vmatmul.mubr.bf16.gmra.mxu0 %v499
      %v753 = vpop.f32.mrf.mxu0
      %v754 = vadd.f32 %v248, %v753
      %v755 = vpop.f32.mrf.mxu0
      %v756 = vpop.f32.mrf.mxu0
      %v757 = vadd.f32 %v248, %v756
      %v758 = vpop.f32.mrf.mxu0
      %759 = vmatprep.mubr.bf16.mxu0 0
      %760 = vmatmul.mubr.bf16.gmra.mxu0 %v502
      %v761 = vpop.f32.mrf.mxu0
      %v762 = vadd.f32 %v248, %v761
      %v763 = vpop.f32.mrf.mxu0
      %v764 = vpop.f32.mrf.mxu0
      %v765 = vadd.f32 %v248, %v764
      %v766 = vpop.f32.mrf.mxu0
      %767 = vmatprep.mubr.bf16.mxu0 0
      %768 = vmatmul.mubr.bf16.gmra.mxu0 %v505
      %v769 = vpop.f32.mrf.mxu0
      %v770 = vadd.f32 %v248, %v769
      %v771 = vpop.f32.mrf.mxu0
      %v772 = vpop.f32.mrf.mxu0
      %v773 = vadd.f32 %v248, %v772
      %v774 = vpop.f32.mrf.mxu0
      %775 = vmatprep.mubr.bf16.mxu0 0
      %776 = vmatmul.mubr.bf16.gmra.mxu0 %v508
      %v777 = vpop.f32.mrf.mxu0
      %v778 = vadd.f32 %v248, %v777
      %v779 = vpop.f32.mrf.mxu0
      %v780 = vpop.f32.mrf.mxu0
      %v781 = vadd.f32 %v248, %v780
      %v782 = vpop.f32.mrf.mxu0
      %783 = vmatprep.mubr.bf16.mxu0 0
      %784 = vmatmul.mubr.bf16.gmra.mxu0 %v511
      %v785 = vpop.f32.mrf.mxu0
      %v786 = vadd.f32 %v248, %v785
      %v787 = vpop.f32.mrf.mxu0
      %v788 = vpop.f32.mrf.mxu0
      %v789 = vadd.f32 %v248, %v788
      %v790 = vpop.f32.mrf.mxu0
      %791 = vmatprep.mubr.bf16.mxu0 0
      %792 = vmatmul.mubr.bf16.gmra.mxu0 %v514
      %v793 = vpop.f32.mrf.mxu0
      %v794 = vadd.f32 %v248, %v793
      %v795 = vpop.f32.mrf.mxu0
      %v796 = vpop.f32.mrf.mxu0
      %v797 = vadd.f32 %v248, %v796
      %v798 = vpop.f32.mrf.mxu0
      %799 = vmatprep.mubr.bf16.mxu0 0
      %800 = vmatmul.mubr.bf16.gmra.mxu0 %v517
      %v801 = vpop.f32.mrf.mxu0
      %v802 = vadd.f32 %v248, %v801
      %v803 = vpop.f32.mrf.mxu0
      %v804 = vpop.f32.mrf.mxu0
      %v805 = vadd.f32 %v248, %v804
      %v806 = vpop.f32.mrf.mxu0
      %807 = vdwg.mxu0
      %v808 = vmax.f32 %v554, 0.0
      %v809 = vmax.f32 %v557, 0.0
      %v810 = vmax.f32 %v562, 0.0
      %v811 = vmax.f32 %v565, 0.0
      %v812 = vmax.f32 %v570, 0.0
      %v813 = vmax.f32 %v573, 0.0
      %v814 = vmax.f32 %v578, 0.0
      %v815 = vmax.f32 %v581, 0.0
      %v816 = vmax.f32 %v586, 0.0
      %v817 = vmax.f32 %v589, 0.0
      %v818 = vmax.f32 %v594, 0.0
      %v819 = vmax.f32 %v597, 0.0
      %v820 = vmax.f32 %v602, 0.0
      %v821 = vmax.f32 %v605, 0.0
      %v822 = vmax.f32 %v610, 0.0
      %v823 = vmax.f32 %v613, 0.0
      %v824 = vmax.f32 %v618, 0.0
      %v825 = vmax.f32 %v621, 0.0
      %v826 = vmax.f32 %v626, 0.0
      %v827 = vmax.f32 %v629, 0.0
      %v828 = vmax.f32 %v634, 0.0
      %v829 = vmax.f32 %v637, 0.0
      %v830 = vmax.f32 %v642, 0.0
      %v831 = vmax.f32 %v645, 0.0
      %v832 = vmax.f32 %v650, 0.0
      %v833 = vmax.f32 %v653, 0.0
      %v834 = vmax.f32 %v658, 0.0
      %v835 = vmax.f32 %v661, 0.0
      %v836 = vmax.f32 %v666, 0.0
      %v837 = vmax.f32 %v669, 0.0
      %v838 = vmax.f32 %v674, 0.0
      %v839 = vmax.f32 %v677, 0.0
      %v840 = vmax.f32 %v682, 0.0
      %v841 = vmax.f32 %v685, 0.0
      %v842 = vmax.f32 %v690, 0.0
      %v843 = vmax.f32 %v693, 0.0
      %v844 = vmax.f32 %v698, 0.0
      %v845 = vmax.f32 %v701, 0.0
      %v846 = vmax.f32 %v706, 0.0
      %v847 = vmax.f32 %v709, 0.0
      %v848 = vmax.f32 %v714, 0.0
      %v849 = vmax.f32 %v717, 0.0
      %v850 = vmax.f32 %v722, 0.0
      %v851 = vmax.f32 %v725, 0.0
      %v852 = vmax.f32 %v730, 0.0
      %v853 = vmax.f32 %v733, 0.0
      %v854 = vmax.f32 %v738, 0.0
      %v855 = vmax.f32 %v741, 0.0
      %v856 = vmax.f32 %v746, 0.0
      %v857 = vmax.f32 %v749, 0.0
      %v858 = vmax.f32 %v754, 0.0
      %v859 = vmax.f32 %v757, 0.0
      %v860 = vmax.f32 %v762, 0.0
      %v861 = vmax.f32 %v765, 0.0
      %v862 = vmax.f32 %v770, 0.0
      %v863 = vmax.f32 %v773, 0.0
      %v864 = vmax.f32 %v778, 0.0
      %v865 = vmax.f32 %v781, 0.0
      %v866 = vmax.f32 %v786, 0.0
      %v867 = vmax.f32 %v789, 0.0
      %v868 = vmax.f32 %v794, 0.0
      %v869 = vmax.f32 %v797, 0.0
      %v870 = vmax.f32 %v802, 0.0
      %v871 = vmax.f32 %v805, 0.0
      %v872 = vpack.c.bf16 %v809, %v808
      %v873 = vpack.c.bf16 %v811, %v810
      %v874 = vpack.c.bf16 %v813, %v812
      %v875 = vpack.c.bf16 %v815, %v814
      %v876 = vpack.c.bf16 %v817, %v816
      %v877 = vpack.c.bf16 %v819, %v818
      %v878 = vpack.c.bf16 %v821, %v820
      %v879 = vpack.c.bf16 %v823, %v822
      %v880 = vpack.c.bf16 %v825, %v824
      %v881 = vpack.c.bf16 %v827, %v826
      %v882 = vpack.c.bf16 %v829, %v828
      %v883 = vpack.c.bf16 %v831, %v830
      %v884 = vpack.c.bf16 %v833, %v832
      %v885 = vpack.c.bf16 %v835, %v834
      %v886 = vpack.c.bf16 %v837, %v836
      %v887 = vpack.c.bf16 %v839, %v838
      %v888 = vpack.c.bf16 %v841, %v840
      %v889 = vpack.c.bf16 %v843, %v842
      %v890 = vpack.c.bf16 %v845, %v844
      %v891 = vpack.c.bf16 %v847, %v846
      %v892 = vpack.c.bf16 %v849, %v848
      %v893 = vpack.c.bf16 %v851, %v850
      %v894 = vpack.c.bf16 %v853, %v852
      %v895 = vpack.c.bf16 %v855, %v854
      %v896 = vpack.c.bf16 %v857, %v856
      %v897 = vpack.c.bf16 %v859, %v858
      %v898 = vpack.c.bf16 %v861, %v860
      %v899 = vpack.c.bf16 %v863, %v862
      %v900 = vpack.c.bf16 %v865, %v864
      %v901 = vpack.c.bf16 %v867, %v866
      %v902 = vpack.c.bf16 %v869, %v868
      %v903 = vpack.c.bf16 %v871, %v870
      %v936 = vunpack.c.l.b16 %v872
      %v937 = vunpack.c.h.b16 %v872
      %v938 = vunpack.c.l.b16 %v873
      %v939 = vunpack.c.h.b16 %v873
      %v940 = vunpack.c.l.b16 %v874
      %v941 = vunpack.c.h.b16 %v874
      %v942 = vunpack.c.l.b16 %v875
      %v943 = vunpack.c.h.b16 %v875
      %v944 = vunpack.c.l.b16 %v876
      %v945 = vunpack.c.h.b16 %v876
      %v946 = vunpack.c.l.b16 %v877
      %v947 = vunpack.c.h.b16 %v877
      %v948 = vunpack.c.l.b16 %v878
      %v949 = vunpack.c.h.b16 %v878
      %v950 = vunpack.c.l.b16 %v879
      %v951 = vunpack.c.h.b16 %v879
      %v952 = vunpack.c.l.b16 %v880
      %v953 = vunpack.c.h.b16 %v880
      %v954 = vunpack.c.l.b16 %v881
      %v955 = vunpack.c.h.b16 %v881
      %v956 = vunpack.c.l.b16 %v882
      %v957 = vunpack.c.h.b16 %v882
      %v958 = vunpack.c.l.b16 %v883
      %v959 = vunpack.c.h.b16 %v883
      %v960 = vunpack.c.l.b16 %v884
      %v961 = vunpack.c.h.b16 %v884
      %v962 = vunpack.c.l.b16 %v885
      %v963 = vunpack.c.h.b16 %v885
      %v964 = vunpack.c.l.b16 %v886
      %v965 = vunpack.c.h.b16 %v886
      %v966 = vunpack.c.l.b16 %v887
      %v967 = vunpack.c.h.b16 %v887
      %v968 = vunpack.c.l.b16 %v888
      %v969 = vunpack.c.h.b16 %v888
      %v970 = vunpack.c.l.b16 %v889
      %v971 = vunpack.c.h.b16 %v889
      %v972 = vunpack.c.l.b16 %v890
      %v973 = vunpack.c.h.b16 %v890
      %v974 = vunpack.c.l.b16 %v891
      %v975 = vunpack.c.h.b16 %v891
      %v976 = vunpack.c.l.b16 %v892
      %v977 = vunpack.c.h.b16 %v892
      %v978 = vunpack.c.l.b16 %v893
      %v979 = vunpack.c.h.b16 %v893
      %v980 = vunpack.c.l.b16 %v894
      %v981 = vunpack.c.h.b16 %v894
      %v982 = vunpack.c.l.b16 %v895
      %v983 = vunpack.c.h.b16 %v895
      %v984 = vunpack.c.l.b16 %v896
      %v985 = vunpack.c.h.b16 %v896
      %v986 = vunpack.c.l.b16 %v897
      %v987 = vunpack.c.h.b16 %v897
      %v988 = vunpack.c.l.b16 %v898
      %v989 = vunpack.c.h.b16 %v898
      %v990 = vunpack.c.l.b16 %v899
      %v991 = vunpack.c.h.b16 %v899
      %v992 = vunpack.c.l.b16 %v900
      %v993 = vunpack.c.h.b16 %v900
      %v994 = vunpack.c.l.b16 %v901
      %v995 = vunpack.c.h.b16 %v901
      %v996 = vunpack.c.l.b16 %v902
      %v997 = vunpack.c.h.b16 %v902
      %v998 = vunpack.c.l.b16 %v903
      %v999 = vunpack.c.h.b16 %v903
      %v1000 = vpack.c.b16 %v936, %v936
      %v1001 = vpack.c.b16 %v937, %v937
      %v1002 = vpack.c.b16 %v938, %v938
      %v1003 = vpack.c.b16 %v939, %v939
      %v1004 = vpack.c.b16 %v940, %v940
      %v1005 = vpack.c.b16 %v941, %v941
      %v1006 = vpack.c.b16 %v942, %v942
      %v1007 = vpack.c.b16 %v943, %v943
      %v1008 = vpack.c.b16 %v944, %v944
      %v1009 = vpack.c.b16 %v945, %v945
      %v1010 = vpack.c.b16 %v946, %v946
      %v1011 = vpack.c.b16 %v947, %v947
      %v1012 = vpack.c.b16 %v948, %v948
      %v1013 = vpack.c.b16 %v949, %v949
      %v1014 = vpack.c.b16 %v950, %v950
      %v1015 = vpack.c.b16 %v951, %v951
      %v1016 = vpack.c.b16 %v952, %v952
      %v1017 = vpack.c.b16 %v953, %v953
      %v1018 = vpack.c.b16 %v954, %v954
      %v1019 = vpack.c.b16 %v955, %v955
      %v1020 = vpack.c.b16 %v956, %v956
      %v1021 = vpack.c.b16 %v957, %v957
      %v1022 = vpack.c.b16 %v958, %v958
      %v1023 = vpack.c.b16 %v959, %v959
      %v1024 = vpack.c.b16 %v960, %v960
      %v1025 = vpack.c.b16 %v961, %v961
      %v1026 = vpack.c.b16 %v962, %v962
      %v1027 = vpack.c.b16 %v963, %v963
      %v1028 = vpack.c.b16 %v964, %v964
      %v1029 = vpack.c.b16 %v965, %v965
      %v1030 = vpack.c.b16 %v966, %v966
      %v1031 = vpack.c.b16 %v967, %v967
      %v1032 = vpack.c.b16 %v968, %v968
      %v1033 = vpack.c.b16 %v969, %v969
      %v1034 = vpack.c.b16 %v970, %v970
      %v1035 = vpack.c.b16 %v971, %v971
      %v1036 = vpack.c.b16 %v972, %v972
      %v1037 = vpack.c.b16 %v973, %v973
      %v1038 = vpack.c.b16 %v974, %v974
      %v1039 = vpack.c.b16 %v975, %v975
      %v1040 = vpack.c.b16 %v976, %v976
      %v1041 = vpack.c.b16 %v977, %v977
      %v1042 = vpack.c.b16 %v978, %v978
      %v1043 = vpack.c.b16 %v979, %v979
      %v1044 = vpack.c.b16 %v980, %v980
      %v1045 = vpack.c.b16 %v981, %v981
      %v1046 = vpack.c.b16 %v982, %v982
      %v1047 = vpack.c.b16 %v983, %v983
      %v1048 = vpack.c.b16 %v984, %v984
      %v1049 = vpack.c.b16 %v985, %v985
      %v1050 = vpack.c.b16 %v986, %v986
      %v1051 = vpack.c.b16 %v987, %v987
      %v1052 = vpack.c.b16 %v988, %v988
      %v1053 = vpack.c.b16 %v989, %v989
      %v1054 = vpack.c.b16 %v990, %v990
      %v1055 = vpack.c.b16 %v991, %v991
      %v1056 = vpack.c.b16 %v992, %v992
      %v1057 = vpack.c.b16 %v993, %v993
      %v1058 = vpack.c.b16 %v994, %v994
      %v1059 = vpack.c.b16 %v995, %v995
      %v1060 = vpack.c.b16 %v996, %v996
      %v1061 = vpack.c.b16 %v997, %v997
      %v1062 = vpack.c.b16 %v998, %v998
      %v1063 = vpack.c.b16 %v999, %v999
      %vm1128 = vcmask 257024
      %1129 = vst.msk [vmem:[%s172] sm:$0xf] %vm1128, %v1000
      %1130 = vst.msk [vmem:[%s172 + $0x4] sm:$0xf] %vm1128, %v1001
      %1131 = vst.msk [vmem:[%s172 + $0x8] sm:$0xf] %vm1128, %v1002
      %1132 = vst.msk [vmem:[%s172 + $0xc] sm:$0xf] %vm1128, %v1003
      %1133 = vst.msk [vmem:[%s172 + $0x10] sm:$0xf] %vm1128, %v1004
      %1134 = vst.msk [vmem:[%s172 + $0x14] sm:$0xf] %vm1128, %v1005
      %1135 = vst.msk [vmem:[%s172 + $0x18] sm:$0xf] %vm1128, %v1006
      %1136 = vst.msk [vmem:[%s172 + $0x1c] sm:$0xf] %vm1128, %v1007
      %1137 = vst.msk [vmem:[%s172 + $0x20] sm:$0xf] %vm1128, %v1008
      %1138 = vst.msk [vmem:[%s172 + $0x24] sm:$0xf] %vm1128, %v1009
      %1139 = vst.msk [vmem:[%s172 + $0x28] sm:$0xf] %vm1128, %v1010
      %1140 = vst.msk [vmem:[%s172 + $0x2c] sm:$0xf] %vm1128, %v1011
      %1141 = vst.msk [vmem:[%s172 + $0x30] sm:$0xf] %vm1128, %v1012
      %1142 = vst.msk [vmem:[%s172 + $0x34] sm:$0xf] %vm1128, %v1013
      %1143 = vst.msk [vmem:[%s172 + $0x38] sm:$0xf] %vm1128, %v1014
      %1144 = vst.msk [vmem:[%s172 + $0x3c] sm:$0xf] %vm1128, %v1015
      %1145 = vst.msk [vmem:[%s172 + $0x40] sm:$0xf] %vm1128, %v1016
      %1146 = vst.msk [vmem:[%s172 + $0x44] sm:$0xf] %vm1128, %v1017
      %1147 = vst.msk [vmem:[%s172 + $0x48] sm:$0xf] %vm1128, %v1018
      %1148 = vst.msk [vmem:[%s172 + $0x4c] sm:$0xf] %vm1128, %v1019
      %1149 = vst.msk [vmem:[%s172 + $0x50] sm:$0xf] %vm1128, %v1020
      %1150 = vst.msk [vmem:[%s172 + $0x54] sm:$0xf] %vm1128, %v1021
      %1151 = vst.msk [vmem:[%s172 + $0x58] sm:$0xf] %vm1128, %v1022
      %1152 = vst.msk [vmem:[%s172 + $0x5c] sm:$0xf] %vm1128, %v1023
      %1153 = vst.msk [vmem:[%s172 + $0x60] sm:$0xf] %vm1128, %v1024
      %1154 = vst.msk [vmem:[%s172 + $0x64] sm:$0xf] %vm1128, %v1025
      %1155 = vst.msk [vmem:[%s172 + $0x68] sm:$0xf] %vm1128, %v1026
      %1156 = vst.msk [vmem:[%s172 + $0x6c] sm:$0xf] %vm1128, %v1027
      %1157 = vst.msk [vmem:[%s172 + $0x70] sm:$0xf] %vm1128, %v1028
      %1158 = vst.msk [vmem:[%s172 + $0x74] sm:$0xf] %vm1128, %v1029
      %1159 = vst.msk [vmem:[%s172 + $0x78] sm:$0xf] %vm1128, %v1030
      %1160 = vst.msk [vmem:[%s172 + $0x7c] sm:$0xf] %vm1128, %v1031
      %1161 = vst.msk [vmem:[%s172 + $0x80] sm:$0xf] %vm1128, %v1032
      %1162 = vst.msk [vmem:[%s172 + $0x84] sm:$0xf] %vm1128, %v1033
      %1163 = vst.msk [vmem:[%s172 + $0x88] sm:$0xf] %vm1128, %v1034
      %1164 = vst.msk [vmem:[%s172 + $0x8c] sm:$0xf] %vm1128, %v1035
      %1165 = vst.msk [vmem:[%s172 + $0x90] sm:$0xf] %vm1128, %v1036
      %1166 = vst.msk [vmem:[%s172 + $0x94] sm:$0xf] %vm1128, %v1037
      %1167 = vst.msk [vmem:[%s172 + $0x98] sm:$0xf] %vm1128, %v1038
      %1168 = vst.msk [vmem:[%s172 + $0x9c] sm:$0xf] %vm1128, %v1039
      %1169 = vst.msk [vmem:[%s172 + $0xa0] sm:$0xf] %vm1128, %v1040
      %1170 = vst.msk [vmem:[%s172 + $0xa4] sm:$0xf] %vm1128, %v1041
      %1171 = vst.msk [vmem:[%s172 + $0xa8] sm:$0xf] %vm1128, %v1042
      %1172 = vst.msk [vmem:[%s172 + $0xac] sm:$0xf] %vm1128, %v1043
      %1173 = vst.msk [vmem:[%s172 + $0xb0] sm:$0xf] %vm1128, %v1044
      %1174 = vst.msk [vmem:[%s172 + $0xb4] sm:$0xf] %vm1128, %v1045
      %1175 = vst.msk [vmem:[%s172 + $0xb8] sm:$0xf] %vm1128, %v1046
      %1176 = vst.msk [vmem:[%s172 + $0xbc] sm:$0xf] %vm1128, %v1047
      %1177 = vst.msk [vmem:[%s172 + $0xc0] sm:$0xf] %vm1128, %v1048
      %1178 = vst.msk [vmem:[%s172 + $0xc4] sm:$0xf] %vm1128, %v1049
      %1179 = vst.msk [vmem:[%s172 + $0xc8] sm:$0xf] %vm1128, %v1050
      %1180 = vst.msk [vmem:[%s172 + $0xcc] sm:$0xf] %vm1128, %v1051
      %1181 = vst.msk [vmem:[%s172 + $0xd0] sm:$0xf] %vm1128, %v1052
      %1182 = vst.msk [vmem:[%s172 + $0xd4] sm:$0xf] %vm1128, %v1053
      %1183 = vst.msk [vmem:[%s172 + $0xd8] sm:$0xf] %vm1128, %v1054
      %1184 = vst.msk [vmem:[%s172 + $0xdc] sm:$0xf] %vm1128, %v1055
      %1185 = vst.msk [vmem:[%s172 + $0xe0] sm:$0xf] %vm1128, %v1056
      %1186 = vst.msk [vmem:[%s172 + $0xe4] sm:$0xf] %vm1128, %v1057
      %1187 = vst.msk [vmem:[%s172 + $0xe8] sm:$0xf] %vm1128, %v1058
      %1188 = vst.msk [vmem:[%s172 + $0xec] sm:$0xf] %vm1128, %v1059
      %1189 = vst.msk [vmem:[%s172 + $0xf0] sm:$0xf] %vm1128, %v1060
      %1190 = vst.msk [vmem:[%s172 + $0xf4] sm:$0xf] %vm1128, %v1061
      %1191 = vst.msk [vmem:[%s172 + $0xf8] sm:$0xf] %vm1128, %v1062
      %1192 = vst.msk [vmem:[%s172 + $0xfc] sm:$0xf] %vm1128, %v1063
      %s1193 = smul.u32 64, %s14
      %p1194 = scmp.lt.s32.totalorder %s1193, 5567
      %s1195 = scalar_select %p1194, %s1193, 5567
      %s1196 = smul.addr %s1195, 4
      %s1197 = scalar_lea.vmem %s3, %s1196
      // Predicated region
      $region33: #{tpu_custom_call.1} parent=31 // pred_check
        %p1198 = pneg %p100
      $region34: #{tpu_custom_call.1} parent=31 // pred_check_branch
        %1200 = sbr.rel (%p1198) target = $region36
      $region35: #{tpu_custom_call.1} parent=31 // pred_region
        %s1201 = smul.u32 64, %s14
      $region36: #{tpu_custom_call.1} parent=31 // pred_fallthru
        _
    $region32: #{tpu_custom_call.1} parent=5 // pred_fallthru
      _
    %p1202 = scmp.le.s32.totalorder 2, %s9
    // Predicated region
    $region37: #{tpu_custom_call.1} parent=5 // pred_check
      %p1203 = pneg %p1202
    $region38: #{tpu_custom_call.1} parent=5 // pred_check_branch
      %1205 = sbr.rel (%p1203) target = $region40
    $region39: #{tpu_custom_call.1} parent=5 // pred_region
      %s1206 = ssub.s32 %s9, 2
      // Predicated region
      $region41: #{tpu_custom_call.1} parent=39 // pred_check
        %p1207 = pneg %p106
      $region42: #{tpu_custom_call.1} parent=39 // pred_check_branch
        %1209 = sbr.rel (%p1207) target = $region44
      $region43: #{tpu_custom_call.1} parent=39 // pred_region
        %s1210 = smul.u32 64, %s15
        %p1211 = scmp.lt.s32.totalorder %s1210, 5567
        %s1212 = scalar_select %p1211, %s1210, 5567
        %s1213 = smul.addr %s1212, 4
        %s1214 = scalar_lea.vmem %s3, %s1213
      $region44: #{tpu_custom_call.1} parent=39 // pred_fallthru
        _
    $region40: #{tpu_custom_call.1} parent=5 // pred_fallthru
      _
  $region6: #{tpu_custom_call.1} parent=0 // loop_footer
    %s13 = sadd.s32 1, %s9
  $region7: #{tpu_custom_call.1} parent=0 // loop_footer_branch
    %8 = sbr.rel target = $region3
  $region8: #{tpu_custom_call.1} parent=0 // loop_exit
    _

</llo_original>
